<compile_context>
chip_gen: v7x
topology: tpu7x:2x2x1
jax: 0.10.0
libtpu: 0.0.40
codegen_flags: <defaults>
</compile_context>

<pallas_src>
import jax
import jax.numpy as jnp
from jax import lax
from jax.experimental import pallas as pl
from jax.experimental.pallas import tpu as pltpu


def _pick_channel_block(C, P, itemsize):
    """Channel-block size for the (C, P) flat view.

    VMEM budget (lane-padding aware): one (cb, P) block occupies
    ceil(cb/8)*8 * ceil(P/128)*128 * itemsize bytes.  BlockSpec double-buffers
    both the input and the (aliased) output, so the pipelined working set is
    ~4x that, plus ~4 * P*P*4 B of transient selector/iota arrays.  Default
    scoped VMEM is 16 MiB (v5e) / 32 MiB (v6e; v7x has only 64 MiB physical),
    so target ~1 MiB blocks and leave headroom.
    """
    p_pad = -(-P // 128) * 128

    def block_bytes(cb):
        return (-(-cb // 8) * 8) * p_pad * itemsize

    # Small tensors: one grid step (whole call is launch-overhead bound anyway).
    if block_bytes(C) <= (1 << 20):
        return C
    # Large tensors: ~1 MiB blocks, a multiple of 8 channels that divides C, so
    # num_blocks >= 4 pipelines DMA against compute and (v7x) uses both TCs.
    cb = max(8, min(C, ((1 << 20) // (p_pad * itemsize)) // 8 * 8))
    while cb > 8 and C % cb != 0:
        cb -= 8
    return cb if C % cb == 0 else C


def _rot_occ_pallas(occ, k, channel_block=None):
    """Rotate occ (C, H, W) by k*90 deg in the (H, W) plane, k in {0, 1, 2, 3}."""
    C, H, W = occ.shape
    assert H == W, "rot90 kernel assumes a square H x W plane"
    assert jnp.issubdtype(occ.dtype, jnp.floating), (
        "MXU permutation path needs a float dtype (v7x MXU has no int path); "
        "cast integer/bool occupancy grids to float before calling")
    P = H * W
    # TODO(synk): add a transpose + reversal path for large planes (P > 1024).
    assert P <= 1024, "flat-plane permutation selector is O((H*W)^2)"

    itemsize = jnp.dtype(occ.dtype).itemsize
    cb = (_pick_channel_block(C, P, itemsize)
          if channel_block is None else min(channel_block, C))
    assert C % cb == 0, "channel_block must divide C"
    num_blocks = C // cb

    x_flat = occ.reshape(C, P)            # free: contiguous row-major reshape
    k_arr = jnp.asarray(k, dtype=jnp.int32).reshape(1)

    pow2 = (W & (W - 1)) == 0
    shift = W.bit_length() - 1

    def kernel(k_ref, x_ref, o_ref):
        kv = k_ref[0]                                    # scalar (SMEM prefetch)
        x = x_ref[...]                                   # (cb, P) lane-dense
        # Build the flat-plane permutation selector from iotas (VPU only).
        src_ax = lax.broadcasted_iota(jnp.int32, (P, P), 0)   # input flat index
        out_ax = lax.broadcasted_iota(jnp.int32, (P, P), 1)   # output flat index
        if pow2:                       # avoid vector integer division
            i = out_ax >> shift        # output row
            j = out_ax & (W - 1)       # output col
        else:
            i = out_ax // W
            j = out_ax - i * W
        src90 = j * W + (H - 1 - i)          # rot90 : out[i,j] = x[j, H-1-i]
        src180 = (P - 1) - out_ax            # rot180: reverse of the flat plane
        src270 = (H - 1 - j) * W + i         # rot270: out[i,j] = x[H-1-j, i]
        src = jnp.where(kv == 1, src90,
              jnp.where(kv == 2, src180,
              jnp.where(kv == 3, src270, out_ax)))       # k == 0 -> identity
        perm = (src_ax == src).astype(x.dtype)           # exact 0/1 permutation
        out = jnp.dot(x, perm, preferred_element_type=jnp.float32)
        o_ref[...] = out.astype(o_ref.dtype)

    out_flat = pl.pallas_call(
        kernel,
        out_shape=jax.ShapeDtypeStruct((C, P), occ.dtype),
        grid_spec=pltpu.PrefetchScalarGridSpec(
            num_scalar_prefetch=1,
            grid=(num_blocks,),
            in_specs=[pl.BlockSpec((cb, P), lambda b, kref: (b, 0))],
            out_specs=pl.BlockSpec((cb, P), lambda b, kref: (b, 0)),
        ),
        input_output_aliases={1: 0},   # occ block -> same output block (in place)
        compiler_params=pltpu.CompilerParams(
            dimension_semantics=("parallel",)),   # channel blocks independent
    )(k_arr, x_flat)
    return out_flat.reshape(C, H, W)


def rotate_people_flow_pallas(occ, dyn, k, *, channel_block=None):
    """Rotate occ (C, H, W) by k*90 deg and roll dyn (8,) by 2*k (wrap).

    k is an int32 scalar in {0, 1, 2, 3}; k == 0 bypasses the kernel entirely
    (no HBM traffic)."""
    C, H, W = occ.shape
    assert H == W, "rot90 kernel assumes a square H x W plane"
    assert dyn.shape == (8,)
    k = jnp.asarray(k, dtype=jnp.int32)

    def _identity(occ_, dyn_):
        return occ_, dyn_

    def _rotate(occ_, dyn_):
        occ_rot = _rot_occ_pallas(occ_, k, channel_block=channel_block)
        dyn_rot = jnp.roll(dyn_, 2 * k)   # matches np.take(range(-2k, 8-2k), wrap)
        return occ_rot, dyn_rot

    return lax.cond(k == 0, _identity, _rotate, occ, dyn)


class RandomRotationPeopleFlowPallas:
    """JAX/Pallas port of the PyTorch RandomRotationPeopleFlow module."""

    def __init__(self, p=0.5, angles_p=(1.0 / 3, 1.0 / 3, 1.0 / 3)):
        assert 0.0 <= p <= 1.0
        assert len(angles_p) == 3
        self.p = p
        self.angles_p = jnp.asarray(angles_p, dtype=jnp.float32)

    def __call__(self, data, key):
        occ, dyn = data
        key_apply, key_angle = jax.random.split(key)
        # TODO(synk): torch.rand / np.random.choice host RNG has no Pallas
        # equivalent; reproduced distributionally with jax.random here (glue).
        apply_rot = jax.random.uniform(key_apply, ()) < self.p
        num_rot = jax.random.choice(
            key_angle, jnp.array([1, 2, 3], dtype=jnp.int32), p=self.angles_p)
        k = jnp.where(apply_rot, num_rot, 0).astype(jnp.int32)
        occ_out, dyn_out = rotate_people_flow_pallas(occ, dyn, k)
        return (occ_out, dyn_out), k


if __name__ == "__main__":
    key = jax.random.PRNGKey(0)
    k_occ, k_dyn, k_mod = jax.random.split(key, 3)

    C, H, W = 4, 16, 16
    occ = jax.random.normal(k_occ, (C, H, W), dtype=jnp.float32)
    dyn = jax.random.normal(k_dyn, (8,), dtype=jnp.float32)

    # Exhaustive check of all k values against jnp.rot90 / jnp.roll.
    rot_fn = jax.jit(rotate_people_flow_pallas)
    for kv in range(4):
        occ_out, dyn_out = rot_fn(occ, dyn, jnp.int32(kv))
        jax.block_until_ready((occ_out, dyn_out))
        occ_ref = jnp.rot90(occ, k=kv, axes=(1, 2))
        dyn_ref = jnp.roll(dyn, 2 * kv)
        assert occ_out.shape == occ.shape and dyn_out.shape == (8,)
        assert jnp.allclose(occ_out, occ_ref, atol=1e-6), f"occ mismatch at k={kv}"
        assert jnp.allclose(dyn_out, dyn_ref, atol=1e-6), f"dyn mismatch at k={kv}"

    # Run the full random module once and re-check with the sampled k.
    module = RandomRotationPeopleFlowPallas(p=0.5, angles_p=(1 / 3, 1 / 3, 1 / 3))
    (occ_out, dyn_out), k = module((occ, dyn), k_mod)
    jax.block_until_ready((occ_out, dyn_out))
    k_host = int(k)
    occ_ref = jnp.rot90(occ, k=k_host, axes=(1, 2)) if k_host > 0 else occ
    dyn_ref = jnp.roll(dyn, 2 * k_host) if k_host > 0 else dyn
    assert jnp.allclose(occ_out, occ_ref, atol=1e-6)
    assert jnp.allclose(dyn_out, dyn_ref, atol=1e-6)

    print("KERNEL_OK")
</pallas_src>

<mosaic_0001>
module attributes {stable_mosaic.version = 11 : i64} {
  func.func @kernel(%arg0: i32, %arg1: memref<1xi32, #tpu.memory_space<smem>>, %arg2: memref<4x256xf32, #tpu.memory_space<vmem>>, %arg3: memref<4x256xf32, #tpu.memory_space<vmem>>) attributes {dimension_semantics = [#tpu.dimension_semantics<parallel>], iteration_bounds = array<i64: 1>, scalar_prefetch = 1 : i64, scratch_operands = 0 : i64, tpu.core_type = #tpu.core_type<tc>, window_params = [{transform_indices = @transform_0, window_bounds = array<i64: 4, 256>}, {transform_indices = @transform_1, window_bounds = array<i64: 4, 256>}]} {
    %c0 = arith.constant 0 : index
    %0 = memref.load %arg1[%c0] : memref<1xi32, #tpu.memory_space<smem>>
    %c0_0 = arith.constant 0 : index
    %c0_1 = arith.constant 0 : index
    %1 = vector.load %arg2[%c0_0, %c0_1] : memref<4x256xf32, #tpu.memory_space<vmem>>, vector<4x256xf32>
    %2 = tpu.iota {dimensions = array<i32: 0>} : vector<256x256xi32>
    %3 = tpu.iota {dimensions = array<i32: 1>} : vector<256x256xi32>
    %c4_i32 = arith.constant 4 : i32
    %4 = vector.broadcast %c4_i32 : i32 to vector<256x256xi32>
    %5 = arith.shrsi %3, %4 : vector<256x256xi32>
    %c15_i32 = arith.constant 15 : i32
    %6 = vector.broadcast %c15_i32 : i32 to vector<256x256xi32>
    %7 = arith.andi %3, %6 : vector<256x256xi32>
    %c16_i32 = arith.constant 16 : i32
    %8 = vector.broadcast %c16_i32 : i32 to vector<256x256xi32>
    %9 = arith.muli %7, %8 : vector<256x256xi32>
    %c15_i32_2 = arith.constant 15 : i32
    %10 = vector.broadcast %c15_i32_2 : i32 to vector<256x256xi32>
    %11 = arith.subi %10, %5 : vector<256x256xi32>
    %12 = arith.addi %9, %11 : vector<256x256xi32>
    %c255_i32 = arith.constant 255 : i32
    %13 = vector.broadcast %c255_i32 : i32 to vector<256x256xi32>
    %14 = arith.subi %13, %3 : vector<256x256xi32>
    %c15_i32_3 = arith.constant 15 : i32
    %15 = vector.broadcast %c15_i32_3 : i32 to vector<256x256xi32>
    %16 = arith.subi %15, %7 : vector<256x256xi32>
    %c16_i32_4 = arith.constant 16 : i32
    %17 = vector.broadcast %c16_i32_4 : i32 to vector<256x256xi32>
    %18 = arith.muli %16, %17 : vector<256x256xi32>
    %19 = arith.addi %18, %5 : vector<256x256xi32>
    %c1_i32 = arith.constant 1 : i32
    %20 = arith.cmpi eq, %0, %c1_i32 : i32
    %c2_i32 = arith.constant 2 : i32
    %21 = arith.cmpi eq, %0, %c2_i32 : i32
    %c3_i32 = arith.constant 3 : i32
    %22 = arith.cmpi eq, %0, %c3_i32 : i32
    %23 = arith.select %22, %19, %3 : vector<256x256xi32>
    %24 = arith.select %21, %14, %23 : vector<256x256xi32>
    %25 = arith.select %20, %12, %24 : vector<256x256xi32>
    %26 = arith.cmpi eq, %2, %25 : vector<256x256xi32>
    %27 = arith.extui %26 : vector<256x256xi1> to vector<256x256xi32>
    %28 = arith.sitofp %27 : vector<256x256xi32> to vector<256x256xf32>
    %cst = arith.constant dense<0.000000e+00> : vector<4x256xf32>
    %29 = tpu.matmul %1, %28, %cst {dimension_numbers = #tpu.dot_dimension_numbers<[1], [0], [0], [1], [0, 0, 1, 1], [], []>} : vector<4x256xf32>, vector<256x256xf32>, vector<4x256xf32> -> vector<4x256xf32>
    %c0_5 = arith.constant 0 : index
    %c0_6 = arith.constant 0 : index
    %30 = vector.load %arg3[%c0_5, %c0_6] : memref<4x256xf32, #tpu.memory_space<vmem>>, vector<4x256xf32>
    tpu.vector_store %arg3[%c0_5, %c0_6], %29 {strides = array<i32>} : memref<4x256xf32, #tpu.memory_space<vmem>>, vector<4x256xf32>,
    return
  }
  func.func @transform_0(%arg0: i32, %arg1: memref<1xi32, #tpu.memory_space<smem>>) -> (i32, i32) {
    %c0_i32 = arith.constant 0 : i32
    %c0_i32_0 = arith.constant 0 : i32
    return %arg0, %c0_i32 : i32, i32
  }
  func.func @transform_1(%arg0: i32, %arg1: memref<1xi32, #tpu.memory_space<smem>>) -> (i32, i32) {
    %c0_i32 = arith.constant 0 : i32
    %c0_i32_0 = arith.constant 0 : i32
    return %arg0, %c0_i32 : i32, i32
  }
}

</mosaic_0001>

<llo_original>
// kernel: branch_0_fun.1
$region0: #{branch_0_fun.1}
  #allocation0 [shape = 'u32[]', space=smem, size = 0x4, offset = 0x4, fixed_abs, tag = 'smem constant byte address 0x4 - core index']
  #allocation1 [shape = 'u32[144,128]{1,0:T(1,128)}', space=vmem, size = 0x12000, scoped, tag = 'internal scratch']
  #allocation2 [shape = 's32[1]{0}', space=sflag, size = 0x4, scoped, tag = 'scoped memory for branch_0_fun.1']
  #allocation3 [shape = 's32[1]{0:T(128)S(6)}', space=smem, size = 0x200, scoped, tag = 'prefetched SMEM operand 0']
  %s0 = inlined_call_operand.<no memory space> [shape: s32[1], index: 0, kind: input, shape index: {}]
  %s1 = inlined_call_operand.vmem [shape: f32[4,256], index: 1, kind: input, shape index: {}, may-alias: {1,2}]
  %s2 = inlined_call_operand.vmem [shape: f32[4,256], index: 2, kind: output, shape index: {}, may-alias: {1,2}]
  %s3 = sld [smem:[#allocation0]]
  $region14: #{branch_0_fun.1} parent=0
    _
  %s5 = ssub.s32 1, %s3
  %s6 = scalar_select 0, %s5, %s3
  %7 = sst [smem:[#allocation3]] %s0
  // Predicated region
  $region2: #{branch_0_fun.1} parent=0 // pred_check
    _
  $region3: #{branch_0_fun.1} parent=0 // pred_check_branch
    %9 = sbr.rel (0) target = $region5
  $region4: #{branch_0_fun.1} parent=0 // pred_region
    _
  $region5: #{branch_0_fun.1} parent=0 // pred_fallthru
    _
  %s10 = sld [smem:[#allocation3]]
  %v11 = vld [vmem:[%s1] sm:$0xff]
  %v12 = vlaneseq
  %v13 = vshrl.u32 %v12, 7
  %v14 = vadd.s32 %v13, 8
  %v15 = vadd.s32 %v13, 16
  %v16 = vadd.s32 %v13, 24
  %v17 = vadd.s32 %v13, 32
  %v18 = vadd.s32 %v13, 40
  %v19 = vadd.s32 %v13, 48
  %v20 = vadd.s32 %v13, 56
  %v21 = vadd.s32 %v13, 64
  %v22 = vadd.s32 %v13, 72
  %v23 = vadd.s32 %v13, 80
  %v24 = vadd.s32 %v13, 88
  %v25 = vadd.s32 %v13, 96
  %v26 = vadd.s32 %v13, 104
  %v27 = vadd.s32 %v13, 112
  %v28 = vadd.s32 %v13, 120
  %v29 = vadd.s32 %v13, 128
  %v30 = vadd.s32 %v13, 136
  %v31 = vadd.s32 %v13, 144
  %v32 = vadd.s32 %v13, 152
  %v33 = vadd.s32 %v13, 160
  %v34 = vadd.s32 %v13, 168
  %v35 = vadd.s32 %v13, 176
  %v36 = vadd.s32 %v13, 184
  %v37 = vadd.s32 %v13, 192
  %v38 = vadd.s32 %v13, 200
  %v39 = vadd.s32 %v13, 208
  %v40 = vadd.s32 %v13, 216
  %v41 = vadd.s32 %v13, 224
  %v42 = vadd.s32 %v13, 232
  %v43 = vadd.s32 %v13, 240
  %v44 = vadd.s32 %v13, 248
  %v45 = vlaneseq
  %v46 = vand.u32 %v45, 127
  %v47 = vadd.s32 %v46, 128
  %v48 = vshra.s32 %v46, 4
  %v49 = vshra.s32 %v47, 4
  %v50 = vand.u32 %v46, 15
  %v51 = vand.u32 %v47, 15
  %v52 = vmul.u32 %v50, 16
  %v53 = vmul.u32 %v51, 16
  %v54 = vsub.s32 15, %v48
  %v55 = vsub.s32 15, %v49
  %v56 = vadd.s32 %v52, %v54
  %v57 = vadd.s32 %v53, %v55
  %v58 = vsub.s32 255, %v46
  %v59 = vsub.s32 255, %v47
  %v60 = vsub.s32 15, %v50
  %v61 = vsub.s32 15, %v51
  %v62 = vmul.u32 %v60, 16
  %v63 = vmul.u32 %v61, 16
  %v64 = vadd.s32 %v62, %v48
  %v65 = vadd.s32 %v63, %v49
  %p66 = scmp.eq.s32.totalorder %s10, 1
  %p67 = scmp.eq.s32.totalorder %s10, 2
  %p68 = scmp.eq.s32.totalorder %s10, 3
  %s69 = scalar_select %p68, 1, 0
  %v70 = vstv %s69
  %vm71 = vcmp.eq.s32.totalorder %v70, 1
  %v72 = vsel %vm71, %v64, %v46
  %v73 = vsel %vm71, %v65, %v47
  %s74 = scalar_select %p67, 1, 0
  %v75 = vstv %s74
  %vm76 = vcmp.eq.s32.totalorder %v75, 1
  %v77 = vsel %vm76, %v58, %v72
  %v78 = vsel %vm76, %v59, %v73
  %s79 = scalar_select %p66, 1, 0
  %v80 = vstv %s79
  %vm81 = vcmp.eq.s32.totalorder %v80, 1
  %v82 = vsel %vm81, %v56, %v77
  %v83 = vsel %vm81, %v57, %v78
  %vm84 = vcmp.eq.s32.totalorder %v13, %v82
  %vm85 = vcmp.eq.s32.totalorder %v13, %v83
  %vm86 = vcmp.eq.s32.totalorder %v14, %v82
  %vm87 = vcmp.eq.s32.totalorder %v14, %v83
  %vm88 = vcmp.eq.s32.totalorder %v15, %v82
  %vm89 = vcmp.eq.s32.totalorder %v15, %v83
  %vm90 = vcmp.eq.s32.totalorder %v16, %v82
  %vm91 = vcmp.eq.s32.totalorder %v16, %v83
  %vm92 = vcmp.eq.s32.totalorder %v17, %v82
  %vm93 = vcmp.eq.s32.totalorder %v17, %v83
  %vm94 = vcmp.eq.s32.totalorder %v18, %v82
  %vm95 = vcmp.eq.s32.totalorder %v18, %v83
  %vm96 = vcmp.eq.s32.totalorder %v19, %v82
  %vm97 = vcmp.eq.s32.totalorder %v19, %v83
  %vm98 = vcmp.eq.s32.totalorder %v20, %v82
  %vm99 = vcmp.eq.s32.totalorder %v20, %v83
  %vm100 = vcmp.eq.s32.totalorder %v21, %v82
  %vm101 = vcmp.eq.s32.totalorder %v21, %v83
  %vm102 = vcmp.eq.s32.totalorder %v22, %v82
  %vm103 = vcmp.eq.s32.totalorder %v22, %v83
  %vm104 = vcmp.eq.s32.totalorder %v23, %v82
  %vm105 = vcmp.eq.s32.totalorder %v23, %v83
  %vm106 = vcmp.eq.s32.totalorder %v24, %v82
  %vm107 = vcmp.eq.s32.totalorder %v24, %v83
  %vm108 = vcmp.eq.s32.totalorder %v25, %v82
  %vm109 = vcmp.eq.s32.totalorder %v25, %v83
  %vm110 = vcmp.eq.s32.totalorder %v26, %v82
  %vm111 = vcmp.eq.s32.totalorder %v26, %v83
  %vm112 = vcmp.eq.s32.totalorder %v27, %v82
  %vm113 = vcmp.eq.s32.totalorder %v27, %v83
  %vm114 = vcmp.eq.s32.totalorder %v28, %v82
  %vm115 = vcmp.eq.s32.totalorder %v28, %v83
  %vm116 = vcmp.eq.s32.totalorder %v29, %v82
  %vm117 = vcmp.eq.s32.totalorder %v29, %v83
  %vm118 = vcmp.eq.s32.totalorder %v30, %v82
  %vm119 = vcmp.eq.s32.totalorder %v30, %v83
  %vm120 = vcmp.eq.s32.totalorder %v31, %v82
  %vm121 = vcmp.eq.s32.totalorder %v31, %v83
  %vm122 = vcmp.eq.s32.totalorder %v32, %v82
  %vm123 = vcmp.eq.s32.totalorder %v32, %v83
  %vm124 = vcmp.eq.s32.totalorder %v33, %v82
  %vm125 = vcmp.eq.s32.totalorder %v33, %v83
  %vm126 = vcmp.eq.s32.totalorder %v34, %v82
  %vm127 = vcmp.eq.s32.totalorder %v34, %v83
  %vm128 = vcmp.eq.s32.totalorder %v35, %v82
  %vm129 = vcmp.eq.s32.totalorder %v35, %v83
  %vm130 = vcmp.eq.s32.totalorder %v36, %v82
  %vm131 = vcmp.eq.s32.totalorder %v36, %v83
  %vm132 = vcmp.eq.s32.totalorder %v37, %v82
  %vm133 = vcmp.eq.s32.totalorder %v37, %v83
  %vm134 = vcmp.eq.s32.totalorder %v38, %v82
  %vm135 = vcmp.eq.s32.totalorder %v38, %v83
  %vm136 = vcmp.eq.s32.totalorder %v39, %v82
  %vm137 = vcmp.eq.s32.totalorder %v39, %v83
  %vm138 = vcmp.eq.s32.totalorder %v40, %v82
  %vm139 = vcmp.eq.s32.totalorder %v40, %v83
  %vm140 = vcmp.eq.s32.totalorder %v41, %v82
  %vm141 = vcmp.eq.s32.totalorder %v41, %v83
  %vm142 = vcmp.eq.s32.totalorder %v42, %v82
  %vm143 = vcmp.eq.s32.totalorder %v42, %v83
  %vm144 = vcmp.eq.s32.totalorder %v43, %v82
  %vm145 = vcmp.eq.s32.totalorder %v43, %v83
  %vm146 = vcmp.eq.s32.totalorder %v44, %v82
  %vm147 = vcmp.eq.s32.totalorder %v44, %v83
  %v148 = vsel %vm84, 1, 0
  %v149 = vsel %vm85, 1, 0
  %v150 = vsel %vm86, 1, 0
  %v151 = vsel %vm87, 1, 0
  %v152 = vsel %vm88, 1, 0
  %v153 = vsel %vm89, 1, 0
  %v154 = vsel %vm90, 1, 0
  %v155 = vsel %vm91, 1, 0
  %v156 = vsel %vm92, 1, 0
  %v157 = vsel %vm93, 1, 0
  %v158 = vsel %vm94, 1, 0
  %v159 = vsel %vm95, 1, 0
  %v160 = vsel %vm96, 1, 0
  %v161 = vsel %vm97, 1, 0
  %v162 = vsel %vm98, 1, 0
  %v163 = vsel %vm99, 1, 0
  %v164 = vsel %vm100, 1, 0
  %v165 = vsel %vm101, 1, 0
  %v166 = vsel %vm102, 1, 0
  %v167 = vsel %vm103, 1, 0
  %v168 = vsel %vm104, 1, 0
  %v169 = vsel %vm105, 1, 0
  %v170 = vsel %vm106, 1, 0
  %v171 = vsel %vm107, 1, 0
  %v172 = vsel %vm108, 1, 0
  %v173 = vsel %vm109, 1, 0
  %v174 = vsel %vm110, 1, 0
  %v175 = vsel %vm111, 1, 0
  %v176 = vsel %vm112, 1, 0
  %v177 = vsel %vm113, 1, 0
  %v178 = vsel %vm114, 1, 0
  %v179 = vsel %vm115, 1, 0
  %v180 = vsel %vm116, 1, 0
  %v181 = vsel %vm117, 1, 0
  %v182 = vsel %vm118, 1, 0
  %v183 = vsel %vm119, 1, 0
  %v184 = vsel %vm120, 1, 0
  %v185 = vsel %vm121, 1, 0
  %v186 = vsel %vm122, 1, 0
  %v187 = vsel %vm123, 1, 0
  %v188 = vsel %vm124, 1, 0
  %v189 = vsel %vm125, 1, 0
  %v190 = vsel %vm126, 1, 0
  %v191 = vsel %vm127, 1, 0
  %v192 = vsel %vm128, 1, 0
  %v193 = vsel %vm129, 1, 0
  %v194 = vsel %vm130, 1, 0
  %v195 = vsel %vm131, 1, 0
  %v196 = vsel %vm132, 1, 0
  %v197 = vsel %vm133, 1, 0
  %v198 = vsel %vm134, 1, 0
  %v199 = vsel %vm135, 1, 0
  %v200 = vsel %vm136, 1, 0
  %v201 = vsel %vm137, 1, 0
  %v202 = vsel %vm138, 1, 0
  %v203 = vsel %vm139, 1, 0
  %v204 = vsel %vm140, 1, 0
  %v205 = vsel %vm141, 1, 0
  %v206 = vsel %vm142, 1, 0
  %v207 = vsel %vm143, 1, 0
  %v208 = vsel %vm144, 1, 0
  %v209 = vsel %vm145, 1, 0
  %v210 = vsel %vm146, 1, 0
  %v211 = vsel %vm147, 1, 0
  %v212 = vcvt.s32.f32 %v148
  %v213 = vcvt.s32.f32 %v149
  %v214 = vcvt.s32.f32 %v150
  %v215 = vcvt.s32.f32 %v151
  %v216 = vcvt.s32.f32 %v152
  %v217 = vcvt.s32.f32 %v153
  %v218 = vcvt.s32.f32 %v154
  %v219 = vcvt.s32.f32 %v155
  %v220 = vcvt.s32.f32 %v156
  %v221 = vcvt.s32.f32 %v157
  %v222 = vcvt.s32.f32 %v158
  %v223 = vcvt.s32.f32 %v159
  %v224 = vcvt.s32.f32 %v160
  %v225 = vcvt.s32.f32 %v161
  %v226 = vcvt.s32.f32 %v162
  %v227 = vcvt.s32.f32 %v163
  %v228 = vcvt.s32.f32 %v164
  %v229 = vcvt.s32.f32 %v165
  %v230 = vcvt.s32.f32 %v166
  %v231 = vcvt.s32.f32 %v167
  %v232 = vcvt.s32.f32 %v168
  %v233 = vcvt.s32.f32 %v169
  %v234 = vcvt.s32.f32 %v170
  %v235 = vcvt.s32.f32 %v171
  %v236 = vcvt.s32.f32 %v172
  %v237 = vcvt.s32.f32 %v173
  %v238 = vcvt.s32.f32 %v174
  %v239 = vcvt.s32.f32 %v175
  %v240 = vcvt.s32.f32 %v176
  %v241 = vcvt.s32.f32 %v177
  %v242 = vcvt.s32.f32 %v178
  %v243 = vcvt.s32.f32 %v179
  %v244 = vcvt.s32.f32 %v180
  %v245 = vcvt.s32.f32 %v181
  %v246 = vcvt.s32.f32 %v182
  %v247 = vcvt.s32.f32 %v183
  %v248 = vcvt.s32.f32 %v184
  %v249 = vcvt.s32.f32 %v185
  %v250 = vcvt.s32.f32 %v186
  %v251 = vcvt.s32.f32 %v187
  %v252 = vcvt.s32.f32 %v188
  %v253 = vcvt.s32.f32 %v189
  %v254 = vcvt.s32.f32 %v190
  %v255 = vcvt.s32.f32 %v191
  %v256 = vcvt.s32.f32 %v192
  %v257 = vcvt.s32.f32 %v193
  %v258 = vcvt.s32.f32 %v194
  %v259 = vcvt.s32.f32 %v195
  %v260 = vcvt.s32.f32 %v196
  %v261 = vcvt.s32.f32 %v197
  %v262 = vcvt.s32.f32 %v198
  %v263 = vcvt.s32.f32 %v199
  %v264 = vcvt.s32.f32 %v200
  %v265 = vcvt.s32.f32 %v201
  %v266 = vcvt.s32.f32 %v202
  %v267 = vcvt.s32.f32 %v203
  %v268 = vcvt.s32.f32 %v204
  %v269 = vcvt.s32.f32 %v205
  %v270 = vcvt.s32.f32 %v206
  %v271 = vcvt.s32.f32 %v207
  %v272 = vcvt.s32.f32 %v208
  %v273 = vcvt.s32.f32 %v209
  %v274 = vcvt.s32.f32 %v210
  %v275 = vcvt.s32.f32 %v211
  %v277 = vcombine.high %v11, %v11
  %279 = vmatprep.subr.mxu0 %v213
  %280 = vmatpush1.msra.mxu0 %v212
  %281 = vmatprep.subr.mxu0 %v215
  %282 = vmatpush1.msra.mxu0 %v214
  %283 = vmatprep.subr.mxu0 %v217
  %284 = vmatpush1.msra.mxu0 %v216
  %285 = vmatprep.subr.mxu0 %v219
  %286 = vmatpush1.msra.mxu0 %v218
  %287 = vmatprep.subr.mxu0 %v221
  %288 = vmatpush1.msra.mxu0 %v220
  %289 = vmatprep.subr.mxu0 %v223
  %290 = vmatpush1.msra.mxu0 %v222
  %291 = vmatprep.subr.mxu0 %v225
  %292 = vmatpush1.msra.mxu0 %v224
  %293 = vmatprep.subr.mxu0 %v227
  %294 = vmatpush1.msra.mxu0 %v226
  %295 = vmatprep.subr.mxu0 %v229
  %296 = vmatpush1.msra.mxu0 %v228
  %297 = vmatprep.subr.mxu0 %v231
  %298 = vmatpush1.msra.mxu0 %v230
  %299 = vmatprep.subr.mxu0 %v233
  %300 = vmatpush1.msra.mxu0 %v232
  %301 = vmatprep.subr.mxu0 %v235
  %302 = vmatpush1.msra.mxu0 %v234
  %303 = vmatprep.subr.mxu0 %v237
  %304 = vmatpush1.msra.mxu0 %v236
  %305 = vmatprep.subr.mxu0 %v239
  %306 = vmatpush1.msra.mxu0 %v238
  %307 = vmatprep.subr.mxu0 %v241
  %308 = vmatpush1.msra.mxu0 %v240
  %309 = vmatprep.subr.mxu0 %v243
  %310 = vmatpush1.msra.mxu0 %v242
  %311 = vmatprep.subr.mxu0 %v245
  %312 = vmatpush1.msra.mxu0 %v244
  %313 = vmatprep.subr.mxu0 %v247
  %314 = vmatpush1.msra.mxu0 %v246
  %315 = vmatprep.subr.mxu0 %v249
  %316 = vmatpush1.msra.mxu0 %v248
  %317 = vmatprep.subr.mxu0 %v251
  %318 = vmatpush1.msra.mxu0 %v250
  %319 = vmatprep.subr.mxu0 %v253
  %320 = vmatpush1.msra.mxu0 %v252
  %321 = vmatprep.subr.mxu0 %v255
  %322 = vmatpush1.msra.mxu0 %v254
  %323 = vmatprep.subr.mxu0 %v257
  %324 = vmatpush1.msra.mxu0 %v256
  %325 = vmatprep.subr.mxu0 %v259
  %326 = vmatpush1.msra.mxu0 %v258
  %327 = vmatprep.subr.mxu0 %v261
  %328 = vmatpush1.msra.mxu0 %v260
  %329 = vmatprep.subr.mxu0 %v263
  %330 = vmatpush1.msra.mxu0 %v262
  %331 = vmatprep.subr.mxu0 %v265
  %332 = vmatpush1.msra.mxu0 %v264
  %333 = vmatprep.subr.mxu0 %v267
  %334 = vmatpush1.msra.mxu0 %v266
  %335 = vmatprep.subr.mxu0 %v269
  %336 = vmatpush1.msra.mxu0 %v268
  %337 = vmatprep.subr.mxu0 %v271
  %338 = vmatpush1.msra.mxu0 %v270
  %339 = vmatprep.subr.mxu0 %v273
  %340 = vmatpush1.msra.mxu0 %v272
  %341 = vmatprep.subr.mxu0 %v275
  %342 = vmatpush1.msra.mxu0 %v274
  %343 = vmatprep.mubr.f32.mxu0 %v277
  %344 = vmatmul.mubr.f32.gmra.mrb[0].mxu0 %v11
  %v345 = vpop.f32.mrb[0].mxu0
  %v346 = vadd.f32 0.0, %v345
  %v347 = vpop.f32.mrb[0].mxu0
  %v348 = vadd.f32 0.0, %v347
  %349 = vdwg.mxu0
  %v352 = vcombine.low %v346, %v348
  %354 = vst [vmem:[%s2] sm:$0xff] %v352
  // Predicated region
  $region6: #{branch_0_fun.1} parent=0 // pred_check
    _
  $region7: #{branch_0_fun.1} parent=0 // pred_check_branch
    %356 = sbr.rel (0) target = $region9
  $region8: #{branch_0_fun.1} parent=0 // pred_region
    _
  $region9: #{branch_0_fun.1} parent=0 // pred_fallthru
    _
  // Predicated region
  $region10: #{branch_0_fun.1} parent=0 // pred_check
    _
  $region11: #{branch_0_fun.1} parent=0 // pred_check_branch
    %358 = sbr.rel (0) target = $region13
  $region12: #{branch_0_fun.1} parent=0 // pred_region
    _
  $region13: #{branch_0_fun.1} parent=0 // pred_fallthru
    _

</llo_original>
